<compile_context>
chip_gen: v6e
topology: v6e:2x2x1
jax: 0.10.0
libtpu: 0.0.40
codegen_flags: <defaults>
</compile_context>

<pallas_src>
import jax
import jax.numpy as jnp
from jax.experimental import pallas as pl
from jax.experimental.pallas import tpu as pltpu

EPS = 1e-5
LANE = 128


def _round_up(x, m):
    return (x + m - 1) // m * m


# ----------------------------------------------------------------------------
# Kernel: grid = (row tile i, out-col tile j, K step k); k innermost, "arbitrary".
# The f32 output tile is resident across k and doubles as the accumulator.
# ----------------------------------------------------------------------------
def linear_block_kernel(x_ref, w_ref, scale_ref, b_ref, o_ref):
    k = pl.program_id(2)

    @pl.when(k == 0)
    def _():
        o_ref[...] = jnp.zeros_like(o_ref)

    # Cast activations to the MXU operand dtype on the VPU (hidden under the MXU).
    x_t = x_ref[...].astype(w_ref.dtype)
    o_ref[...] += jnp.dot(x_t, w_ref[...], preferred_element_type=jnp.float32)

    @pl.when(k == pl.num_programs(2) - 1)
    def _():
        # f32 epilogue: per-column BN scale, fused bias, ReLU — all in place.
        y = o_ref[...] * scale_ref[...] + b_ref[...]
        o_ref[...] = jnp.maximum(y, 0.0).astype(o_ref.dtype)


# ----------------------------------------------------------------------------
# Host-side, ONCE-per-weight-update folding (hoisted out of the forward path).
# ----------------------------------------------------------------------------
def fold_linear_block_params(wc, bc, wt, bt, gamma, beta, run_mean, run_var,
                             *, eps=EPS, compute_dtype=jnp.bfloat16):
    """Fold crossover Linear + (eval) Dropout + transform Linear + BatchNorm1d.

    PyTorch layouts: wc (F_in,F_in), bc (F_in,), wt (F_out,F_in), bt (F_out,),
    BN params (F_out,). Returns padded, MXU-ready tensors + the true F_out.
    """
    wc = wc.astype(jnp.float32)
    bc = bc.astype(jnp.float32)
    wt = wt.astype(jnp.float32)
    bt = bt.astype(jnp.float32)

    F_out, F_in = wt.shape
    K_pad = _round_up(F_in, LANE)
    N_pad = _round_up(F_out, LANE)

    w_fused = wc.T @ wt.T                                       # (F_in, F_out), f32
    scale = gamma.astype(jnp.float32) * jax.lax.rsqrt(run_var.astype(jnp.float32) + eps)
    bias = (bc @ wt.T + bt - run_mean.astype(jnp.float32)) * scale + beta.astype(jnp.float32)

    w_p = jnp.pad(w_fused, ((0, K_pad - F_in), (0, N_pad - F_out))).astype(compute_dtype)
    scale_p = jnp.pad(scale, (0, N_pad - F_out)).reshape(1, N_pad).astype(jnp.float32)
    b_p = jnp.pad(bias, (0, N_pad - F_out)).reshape(1, N_pad).astype(jnp.float32)
    return w_p, scale_p, b_p, F_out


# ----------------------------------------------------------------------------
# Fused forward: relu((x @ W) * scale + bias) on pre-folded, pre-padded params.
# ----------------------------------------------------------------------------
def linear_block_fused(x, w_p, scale_p, b_p, f_out, *, tile_rows=512):
    M, F_in = x.shape
    K_pad, N_pad = w_p.shape
    x_itemsize = jnp.dtype(x.dtype).itemsize

    # ---- row tiling: even out tiles so the last one isn't mostly padding -----
    n_rt = 1 if M <= tile_rows else -(-M // tile_rows)
    tm = _round_up(-(-M // n_rt), 16)            # 16: bf16 sublane packing
    M_pad = tm * n_rt

    # ---- output-column tile: prefer 512 / 256 (full 2x256 MXU width) ---------
    tn = None
    for cand in (512, 256):
        if N_pad % cand == 0:
            tn = cand
            break
    if tn is None:
        tn = N_pad if N_pad <= 512 else LANE
    # Tiny-problem megacore split (v7x has 2 TCs): give the parallel j axis >=2 blocks.
    if n_rt == 1 and N_pad // tn == 1 and N_pad >= 256 and (N_pad // 2) % LANE == 0:
        tn = N_pad // 2

    # ---- K tile ---------------------------------------------------------------
    tk = None
    for cand in (1024, 512, 256):
        if K_pad % cand == 0:
            tk = cand
            break
    if tk is None:
        tk = K_pad if K_pad <= 1024 else LANE

    k_steps = K_pad // tk
    grid = (M_pad // tm, N_pad // tn, k_steps)

    # ---- pad x only when needed (no host bf16 cast; cast happens in-kernel) ---
    if M_pad != M or K_pad != F_in:
        x_p = jnp.pad(x, ((0, M_pad - M), (0, K_pad - F_in)))
    else:
        x_p = x

    # ---- weight pipelining depth ----------------------------------------------
    if tm <= 128 and k_steps >= 3:
        w_spec = pl.BlockSpec((tk, tn), lambda i, j, k: (k, j),
                              pipeline_mode=pl.Buffered(3))
        w_bufs = 3
    else:
        w_spec = pl.BlockSpec((tk, tn), lambda i, j, k: (k, j))
        w_bufs = 2

    # ---- generation-aware scoped-VMEM limit ------------------------------------
    est = (2 * tm * tk * x_itemsize            # x tiles, double-buffered
           + w_bufs * tk * tn * 2              # bf16 weight tiles
           + 2 * 2 * tn * 4 * 2                # scale + bias tiles
           + 2 * tm * tn * 4)                  # f32 output/accumulator tile
    try:
        vmem_phys = pltpu.get_tpu_info().vmem_capacity_bytes
    except Exception:
        vmem_phys = 64 << 20                   # conservative (v7x per-TC VMEM)
    vmem_cap = (vmem_phys * 3) // 4
    vmem_limit = min(est + (16 << 20), vmem_cap) if est > (12 << 20) else None

    cost = pl.CostEstimate(
        flops=2 * M_pad * K_pad * N_pad,
        bytes_accessed=(M_pad * K_pad * x_itemsize
                        + K_pad * N_pad * 2
                        + M_pad * N_pad * 4
                        + 2 * N_pad * 4),
        transcendentals=0)

    out = pl.pallas_call(
        linear_block_kernel,
        out_shape=jax.ShapeDtypeStruct((M_pad, N_pad), jnp.float32),
        grid_spec=pltpu.PrefetchScalarGridSpec(
            num_scalar_prefetch=0,
            grid=grid,
            in_specs=[
                pl.BlockSpec((tm, tk), lambda i, j, k: (i, k)),   # x tile (native dtype)
                w_spec,                                            # fused weight (bf16)
                pl.BlockSpec((1, tn), lambda i, j, k: (0, j)),     # BN scale (f32)
                pl.BlockSpec((1, tn), lambda i, j, k: (0, j)),     # fused bias (f32)
            ],
            out_specs=pl.BlockSpec((tm, tn), lambda i, j, k: (i, j)),
        ),
        compiler_params=pltpu.CompilerParams(
            dimension_semantics=("parallel", "parallel", "arbitrary"),
            vmem_limit_bytes=vmem_limit),
        cost_estimate=cost,
    )(x_p, w_p, scale_p, b_p)

    if M_pad == M and N_pad == f_out:
        return out.astype(x.dtype)
    return out[:M, :f_out].astype(x.dtype)


def linear_block(x, wc, bc, wt, bt, gamma, beta, run_mean, run_var, **kw):
    """Convenience wrapper (folds per call; prefer folding once + linear_block_fused)."""
    w_p, scale_p, b_p, f_out = fold_linear_block_params(
        wc, bc, wt, bt, gamma, beta, run_mean, run_var)
    return linear_block_fused(x, w_p, scale_p, b_p, f_out, **kw)


def reference(x, wc, bc, wt, bt, gamma, beta, run_mean, run_var):
    """Unfused eval-mode forward in f32 (crossover -> dropout(id) -> transform -> BN -> ReLU)."""
    h = x @ wc.T + bc
    y = h @ wt.T + bt
    y = (y - run_mean) / jnp.sqrt(run_var + EPS) * gamma + beta
    return jnp.maximum(y, 0.0)


if __name__ == "__main__":
    # Small shapes consistent with the module: batch=16, features_in=32, features_out=64.
    N, F_IN, F_OUT = 16, 32, 64

    key = jax.random.PRNGKey(0)
    kx, kwc, kbc, kwt, kbt, kg, kb, km, kv = jax.random.split(key, 9)

    x = jax.random.normal(kx, (N, F_IN), dtype=jnp.float32)

    # nn.Linear-style init: uniform(-1/sqrt(fan_in), 1/sqrt(fan_in)).
    bound = 1.0 / jnp.sqrt(jnp.float32(F_IN))
    wc = jax.random.uniform(kwc, (F_IN, F_IN), minval=-bound, maxval=bound)
    bc = jax.random.uniform(kbc, (F_IN,), minval=-bound, maxval=bound)
    wt = jax.random.uniform(kwt, (F_OUT, F_IN), minval=-bound, maxval=bound)
    bt = jax.random.uniform(kbt, (F_OUT,), minval=-bound, maxval=bound)

    # Non-trivial BatchNorm1d running stats / affine params to exercise the epilogue.
    gamma = jax.random.uniform(kg, (F_OUT,), minval=0.5, maxval=1.5)
    beta = 0.1 * jax.random.normal(kb, (F_OUT,))
    run_mean = 0.1 * jax.random.normal(km, (F_OUT,))
    run_var = jax.random.uniform(kv, (F_OUT,), minval=0.5, maxval=1.5)

    # Fold once (per weight update), then run the fused kernel.
    w_p, scale_p, b_p, f_out = fold_linear_block_params(
        wc, bc, wt, bt, gamma, beta, run_mean, run_var)
    out = linear_block_fused(x, w_p, scale_p, b_p, f_out)
    out = jax.block_until_ready(out)

    ref = reference(x, wc, bc, wt, bt, gamma, beta, run_mean, run_var)
    assert out.shape == (N, F_OUT)
    # bf16 MXU operands (f32 accumulation + f32 BN/bias epilogue) -> loosened tolerance.
    assert jnp.allclose(out, ref, atol=5e-2, rtol=5e-2), "mismatch vs reference"

    print("KERNEL_OK")
</pallas_src>

<mosaic_0001>
module attributes {stable_mosaic.version = 11 : i64} {
  func.func @linear_block_kernel(%arg0: i32, %arg1: i32, %arg2: i32, %arg3: memref<16x128xf32, #tpu.memory_space<vmem>>, %arg4: memref<128x128xbf16, #tpu.memory_space<vmem>>, %arg5: memref<1x128xf32, #tpu.memory_space<vmem>>, %arg6: memref<1x128xf32, #tpu.memory_space<vmem>>, %arg7: memref<16x128xf32, #tpu.memory_space<vmem>>) attributes {dimension_semantics = [#tpu.dimension_semantics<parallel>, #tpu.dimension_semantics<parallel>, #tpu.dimension_semantics<arbitrary>], iteration_bounds = array<i64: 1, 1, 1>, scalar_prefetch = 0 : i64, scratch_operands = 0 : i64, tpu.core_type = #tpu.core_type<tc>, window_params = [{transform_indices = @transform_0, window_bounds = array<i64: 16, 128>}, {transform_indices = @transform_1, window_bounds = array<i64: 128, 128>}, {transform_indices = @transform_2, window_bounds = array<i64: 1, 128>}, {transform_indices = @transform_3, window_bounds = array<i64: 1, 128>}, {transform_indices = @transform_4, window_bounds = array<i64: 16, 128>}]} {
    %c0_i32 = arith.constant 0 : i32
    %0 = arith.cmpi eq, %arg2, %c0_i32 : i32
    %1 = arith.extui %0 : i1 to i32
    %c0_i32_0 = arith.constant 0 : i32
    %2 = arith.cmpi ne, %1, %c0_i32_0 : i32
    scf.if %2 {
      %cst_10 = arith.constant 0.000000e+00 : f32
      %13 = vector.broadcast %cst_10 : f32 to vector<16x128xf32>
      %c0_11 = arith.constant 0 : index
      %c0_12 = arith.constant 0 : index
      %14 = vector.load %arg7[%c0_11, %c0_12] : memref<16x128xf32, #tpu.memory_space<vmem>>, vector<16x128xf32>
      tpu.vector_store %arg7[%c0_11, %c0_12], %13 {strides = array<i32>} : memref<16x128xf32, #tpu.memory_space<vmem>>, vector<16x128xf32>,
    } else {
    }
    %c0 = arith.constant 0 : index
    %c0_1 = arith.constant 0 : index
    %3 = vector.load %arg3[%c0, %c0_1] : memref<16x128xf32, #tpu.memory_space<vmem>>, vector<16x128xf32>
    %4 = arith.truncf %3 : vector<16x128xf32> to vector<16x128xbf16>
    %c0_2 = arith.constant 0 : index
    %c0_3 = arith.constant 0 : index
    %5 = vector.load %arg7[%c0_2, %c0_3] : memref<16x128xf32, #tpu.memory_space<vmem>>, vector<16x128xf32>
    %c0_4 = arith.constant 0 : index
    %c0_5 = arith.constant 0 : index
    %6 = vector.load %arg4[%c0_4, %c0_5] : memref<128x128xbf16, #tpu.memory_space<vmem>>, vector<128x128xbf16>
    %cst = arith.constant dense<0.000000e+00> : vector<16x128xf32>
    %7 = tpu.matmul %4, %6, %cst {dimension_numbers = #tpu.dot_dimension_numbers<[1], [0], [0], [1], [0, 0, 1, 1], [], []>} : vector<16x128xbf16>, vector<128x128xbf16>, vector<16x128xf32> -> vector<16x128xf32>
    %8 = arith.addf %5, %7 : vector<16x128xf32>
    %c0_6 = arith.constant 0 : index
    %c0_7 = arith.constant 0 : index
    %9 = vector.load %arg7[%c0_6, %c0_7] : memref<16x128xf32, #tpu.memory_space<vmem>>, vector<16x128xf32>
    tpu.vector_store %arg7[%c0_6, %c0_7], %8 {strides = array<i32>} : memref<16x128xf32, #tpu.memory_space<vmem>>, vector<16x128xf32>,
    %c0_i32_8 = arith.constant 0 : i32
    %10 = arith.cmpi eq, %arg2, %c0_i32_8 : i32
    %11 = arith.extui %10 : i1 to i32
    %c0_i32_9 = arith.constant 0 : i32
    %12 = arith.cmpi ne, %11, %c0_i32_9 : i32
    scf.if %12 {
      %c0_10 = arith.constant 0 : index
      %c0_11 = arith.constant 0 : index
      %13 = vector.load %arg7[%c0_10, %c0_11] : memref<16x128xf32, #tpu.memory_space<vmem>>, vector<16x128xf32>
      %c0_12 = arith.constant 0 : index
      %c0_13 = arith.constant 0 : index
      %14 = vector.load %arg5[%c0_12, %c0_13] : memref<1x128xf32, #tpu.memory_space<vmem>>, vector<1x128xf32>
      %15 = vector.broadcast %14 : vector<1x128xf32> to vector<16x128xf32>
      %16 = arith.mulf %13, %15 : vector<16x128xf32>
      %c0_14 = arith.constant 0 : index
      %c0_15 = arith.constant 0 : index
      %17 = vector.load %arg6[%c0_14, %c0_15] : memref<1x128xf32, #tpu.memory_space<vmem>>, vector<1x128xf32>
      %18 = vector.broadcast %17 : vector<1x128xf32> to vector<16x128xf32>
      %19 = arith.addf %16, %18 : vector<16x128xf32>
      %cst_16 = arith.constant 0.000000e+00 : f32
      %20 = vector.broadcast %cst_16 : f32 to vector<16x128xf32>
      %21 = arith.maximumf %19, %20 : vector<16x128xf32>
      %c0_17 = arith.constant 0 : index
      %c0_18 = arith.constant 0 : index
      %22 = vector.load %arg7[%c0_17, %c0_18] : memref<16x128xf32, #tpu.memory_space<vmem>>, vector<16x128xf32>
      tpu.vector_store %arg7[%c0_17, %c0_18], %21 {strides = array<i32>} : memref<16x128xf32, #tpu.memory_space<vmem>>, vector<16x128xf32>,
    } else {
    }
    return
  }
  func.func @transform_0(%arg0: i32, %arg1: i32, %arg2: i32) -> (i32, i32) {
    %c0_i32 = arith.constant 0 : i32
    return %arg0, %arg2 : i32, i32
  }
  func.func @transform_1(%arg0: i32, %arg1: i32, %arg2: i32) -> (i32, i32) {
    %c0_i32 = arith.constant 0 : i32
    return %arg2, %arg1 : i32, i32
  }
  func.func @transform_2(%arg0: i32, %arg1: i32, %arg2: i32) -> (i32, i32) {
    %c0_i32 = arith.constant 0 : i32
    %c0_i32_0 = arith.constant 0 : i32
    return %c0_i32, %arg1 : i32, i32
  }
  func.func @transform_3(%arg0: i32, %arg1: i32, %arg2: i32) -> (i32, i32) {
    %c0_i32 = arith.constant 0 : i32
    %c0_i32_0 = arith.constant 0 : i32
    return %c0_i32, %arg1 : i32, i32
  }
  func.func @transform_4(%arg0: i32, %arg1: i32, %arg2: i32) -> (i32, i32) {
    %c0_i32 = arith.constant 0 : i32
    return %arg0, %arg1 : i32, i32
  }
}

</mosaic_0001>

<llo_original>
// kernel: tpu_custom_call.1
$region0: #{tpu_custom_call.1}
  #allocation0 [shape = 'u32[]', space=smem, size = 0x4, offset = 0x4, fixed_abs, tag = 'smem constant byte address 0x4 - core index']
  #allocation1 [shape = 'u32[144,128]{1,0:T(1,128)}', space=vmem, size = 0x12000, scoped, tag = 'internal scratch']
  %s0 = inlined_call_operand.hbm [shape: f32[16,128], index: 0, kind: input, shape index: {}]
  %s1 = inlined_call_operand.hbm [shape: bf16[128,128], index: 1, kind: input, shape index: {}]
  %s2 = inlined_call_operand.vmem [shape: f32[1,128], index: 2, kind: input, shape index: {}]
  %s3 = inlined_call_operand.vmem [shape: f32[1,128], index: 3, kind: input, shape index: {}]
  %s4 = inlined_call_operand.hbm [shape: f32[16,128], index: 4, kind: output, shape index: {}]
  %s5 = sld [smem:[#allocation0]]
  $region42: #{tpu_custom_call.1} parent=0
    _
  %s7 = ssub.s32 1, %s5
  %s8 = scalar_select 0, %s7, %s5
  $region1: #{tpu_custom_call.1} parent=0
    #allocation2 [shape = 'u8[8192]{0}', space=vmem, size = 0x2000, scoped, tag = 'input window, operand 0, single buffered']
    #allocation3 [shape = 's32[1]{0}', space=sflag, size = 0x4, scoped, tag = 'scoped memory for tpu_custom_call.1']
    #allocation4 [shape = 's32[1]{0}', space=sflag, size = 0x4, scoped, tag = 'scoped memory for tpu_custom_call.1']
    #allocation5 [shape = 'u8[32768]{0}', space=vmem, size = 0x8000, scoped, tag = 'input window, operand 1, single buffered']
    #allocation6 [shape = 's32[1]{0}', space=sflag, size = 0x4, scoped, tag = 'scoped memory for tpu_custom_call.1']
    #allocation7 [shape = 'u8[8192]{0}', space=vmem, size = 0x2000, scoped, tag = 'output window, operand 0, single buffered']
    %9 = vsyncpa [#allocation3], 0
    %10 = vsyncpa [#allocation6], 0
    %11 = vsyncpa [#allocation4], 0
    // Predicated region
    $region2: #{tpu_custom_call.1} parent=1 // pred_check
      _
    $region3: #{tpu_custom_call.1} parent=1 // pred_check_branch
      %13 = sbr.rel (0) target = $region5
    $region4: #{tpu_custom_call.1} parent=1 // pred_region
      %s15 = ssub.s32 256, 256
      %16 = vsyncadd [#allocation3], %s15
      %s17 = sshll.u32 [#allocation2], 4
      %s18 = int_to_ptr.vmem [resolvable:$true] %s17
      %23 = dma.hbm_to_vmem [thread:$0]  %s0, 256, %s18, [#allocation3], 128, 128, 8
    $region5: #{tpu_custom_call.1} parent=1 // pred_fallthru
      _
    // Predicated region
    $region6: #{tpu_custom_call.1} parent=1 // pred_check
      _
    $region7: #{tpu_custom_call.1} parent=1 // pred_check_branch
      %25 = sbr.rel (0) target = $region9
    $region8: #{tpu_custom_call.1} parent=1 // pred_region
      %s27 = ssub.s32 1024, 1024
      %28 = vsyncadd [#allocation6], %s27
      %s29 = sshll.u32 [#allocation5], 4
      %s30 = int_to_ptr.vmem [resolvable:$true] %s29
      %35 = dma.hbm_to_vmem [thread:$0]  %s1, 1024, %s30, [#allocation6], 64, 64, 4
    $region9: #{tpu_custom_call.1} parent=1 // pred_fallthru
      _
    // Predicated region
    $region10: #{tpu_custom_call.1} parent=1 // pred_check
      _
    $region11: #{tpu_custom_call.1} parent=1 // pred_check_branch
      %37 = sbr.rel (0) target = $region13
    $region12: #{tpu_custom_call.1} parent=1 // pred_region
      _
    $region13: #{tpu_custom_call.1} parent=1 // pred_fallthru
      _
    // Predicated region
    $region14: #{tpu_custom_call.1} parent=1 // pred_check
      _
    $region15: #{tpu_custom_call.1} parent=1 // pred_check_branch
      %39 = sbr.rel (0) target = $region17
    $region16: #{tpu_custom_call.1} parent=1 // pred_region
      _
    $region17: #{tpu_custom_call.1} parent=1 // pred_fallthru
      _
    // Predicated region
    $region18: #{tpu_custom_call.1} parent=1 // pred_check
      _
    $region19: #{tpu_custom_call.1} parent=1 // pred_check_branch
      %41 = sbr.rel (0) target = $region21
    $region20: #{tpu_custom_call.1} parent=1 // pred_region
      %42 = dma.done [#allocation3], 256
    $region21: #{tpu_custom_call.1} parent=1 // pred_fallthru
      _
    // Predicated region
    $region22: #{tpu_custom_call.1} parent=1 // pred_check
      _
    $region23: #{tpu_custom_call.1} parent=1 // pred_check_branch
      %44 = sbr.rel (0) target = $region25
    $region24: #{tpu_custom_call.1} parent=1 // pred_region
      %45 = dma.done [#allocation6], 1024
    $region25: #{tpu_custom_call.1} parent=1 // pred_fallthru
      _
    %p47 = scmp.eq.s32.totalorder 0, 0
    // Predicated region
    $region26: #{tpu_custom_call.1} parent=1 // pred_check
      %p48 = pneg %p47
    $region27: #{tpu_custom_call.1} parent=1 // pred_check_branch
      %50 = sbr.rel (%p48) target = $region29
    $region28: #{tpu_custom_call.1} parent=1 // pred_region
      %51 = vst [vmem:[#allocation7] sm:$0xff] 0.0
      %52 = vst [vmem:[#allocation7 + $0x8] sm:$0xff] 0.0
    $region29: #{tpu_custom_call.1} parent=1 // pred_fallthru
      _
    %v53 = vld [vmem:[#allocation2] sm:$0xff]
    %v54 = vld [vmem:[#allocation2 + $0x8] sm:$0xff]
    %v55 = vpack.c.bf16 %v54, %v53
    %v56 = vld [vmem:[#allocation7] sm:$0xff]
    %v57 = vld [vmem:[#allocation7 + $0x8] sm:$0xff]
    %v58 = vld [vmem:[#allocation5] sm:$0xf]
    %v59 = vld [vmem:[#allocation5 + $0x4] sm:$0xf]
    %v60 = vld [vmem:[#allocation5 + $0x8] sm:$0xf]
    %v61 = vld [vmem:[#allocation5 + $0xc] sm:$0xf]
    %v62 = vld [vmem:[#allocation5 + $0x10] sm:$0xf]
    %v63 = vld [vmem:[#allocation5 + $0x14] sm:$0xf]
    %v64 = vld [vmem:[#allocation5 + $0x18] sm:$0xf]
    %v65 = vld [vmem:[#allocation5 + $0x1c] sm:$0xf]
    %v66 = vld [vmem:[#allocation5 + $0x20] sm:$0xf]
    %v67 = vld [vmem:[#allocation5 + $0x24] sm:$0xf]
    %v68 = vld [vmem:[#allocation5 + $0x28] sm:$0xf]
    %v69 = vld [vmem:[#allocation5 + $0x2c] sm:$0xf]
    %v70 = vld [vmem:[#allocation5 + $0x30] sm:$0xf]
    %v71 = vld [vmem:[#allocation5 + $0x34] sm:$0xf]
    %v72 = vld [vmem:[#allocation5 + $0x38] sm:$0xf]
    %v73 = vld [vmem:[#allocation5 + $0x3c] sm:$0xf]
    %v90 = vunpack.c.l.b16 %v58
    %v91 = vunpack.c.l.b16 %v59
    %v92 = vunpack.c.l.b16 %v60
    %v93 = vunpack.c.l.b16 %v61
    %v94 = vunpack.c.l.b16 %v62
    %v95 = vunpack.c.l.b16 %v63
    %v96 = vunpack.c.l.b16 %v64
    %v97 = vunpack.c.l.b16 %v65
    %v98 = vunpack.c.l.b16 %v66
    %v99 = vunpack.c.l.b16 %v67
    %v100 = vunpack.c.l.b16 %v68
    %v101 = vunpack.c.l.b16 %v69
    %v102 = vunpack.c.l.b16 %v70
    %v103 = vunpack.c.l.b16 %v71
    %v104 = vunpack.c.l.b16 %v72
    %v105 = vunpack.c.l.b16 %v73
    %v106 = vpack.c.b16 %v91, %v90
    %v107 = vpack.c.b16 %v93, %v92
    %v108 = vpack.c.b16 %v95, %v94
    %v109 = vpack.c.b16 %v97, %v96
    %v110 = vpack.c.b16 %v99, %v98
    %v111 = vpack.c.b16 %v101, %v100
    %v112 = vpack.c.b16 %v103, %v102
    %v113 = vpack.c.b16 %v105, %v104
    %122 = vmatprep.subr.bf16.mxu0 0
    %123 = vmatpush1.bf16.msra.mxu0 %v113
    %124 = vmatprep.subr.bf16.mxu0 0
    %125 = vmatpush1.bf16.msra.mxu0 %v112
    %126 = vmatprep.subr.bf16.mxu0 0
    %127 = vmatpush1.bf16.msra.mxu0 %v111
    %128 = vmatprep.subr.bf16.mxu0 0
    %129 = vmatpush1.bf16.msra.mxu0 %v110
    %130 = vmatprep.subr.bf16.mxu0 0
    %131 = vmatpush1.bf16.msra.mxu0 %v109
    %132 = vmatprep.subr.bf16.mxu0 0
    %133 = vmatpush1.bf16.msra.mxu0 %v108
    %134 = vmatprep.subr.bf16.mxu0 0
    %135 = vmatpush1.bf16.msra.mxu0 %v107
    %136 = vmatprep.subr.bf16.mxu0 0
    %137 = vmatpush1.bf16.msra.mxu0 %v106
    %138 = vmatprep.subr.bf16.mxu0 0
    %139 = vmatpush2.bf16.msra.mxu0 0
    %140 = vmatprep.subr.bf16.mxu0 0
    %141 = vmatpush2.bf16.msra.mxu0 0
    %142 = vmatprep.subr.bf16.mxu0 0
    %143 = vmatpush2.bf16.msra.mxu0 0
    %144 = vmatprep.subr.bf16.mxu0 0
    %145 = vmatpush2.bf16.msra.mxu0 0
    %146 = vmatprep.subr.bf16.mxu0 0
    %147 = vmatpush2.bf16.msra.mxu0 0
    %148 = vmatprep.subr.bf16.mxu0 0
    %149 = vmatpush2.bf16.msra.mxu0 0
    %150 = vmatprep.subr.bf16.mxu0 0
    %151 = vmatpush2.bf16.msra.mxu0 0
    %152 = vmatprep.subr.bf16.mxu0 0
    %153 = vmatpush2.bf16.msra.mxu0 0
    %154 = vmatprep.mubr.bf16.mxu0 0
    %155 = vmatmul.mubr.bf16.gmra.mxu0 %v55
    %v156 = vpop.f32.mrf.mxu0
    %v157 = vadd.f32 0.0, %v156
    %v158 = vpop.f32.mrf.mxu0
    %v159 = vpop.f32.mrf.mxu0
    %v160 = vadd.f32 0.0, %v159
    %v161 = vpop.f32.mrf.mxu0
    %162 = vdwg.mxu0
    %v163 = vadd.f32 %v56, %v157
    %v164 = vadd.f32 %v57, %v160
    %165 = vst [vmem:[#allocation7] sm:$0xff] %v163
    %166 = vst [vmem:[#allocation7 + $0x8] sm:$0xff] %v164
    // Predicated region
    $region30: #{tpu_custom_call.1} parent=1 // pred_check
      %p167 = pneg %p47
    $region31: #{tpu_custom_call.1} parent=1 // pred_check_branch
      %169 = sbr.rel (%p167) target = $region33
    $region32: #{tpu_custom_call.1} parent=1 // pred_region
      %v170 = vld [vmem:[#allocation7] sm:$0xff]
      %v171 = vld [vmem:[#allocation7 + $0x8] sm:$0xff]
      %v172 = vld [vmem:[%s2] sm:$0x1]
      %v174 = vlaneseq
      %v175 = vshrl.u32 %v174, 7
      %v176 = vsub.s32 0, %v175
      %v177 = vrot.slane %v172, %v176
      %v179 = vmul.f32 %v170, %v177
      %v180 = vmul.f32 %v171, %v177
      %v181 = vld [vmem:[%s3] sm:$0x1]
      %v183 = vlaneseq
      %v184 = vshrl.u32 %v183, 7
      %v185 = vsub.s32 0, %v184
      %v186 = vrot.slane %v181, %v185
      %v188 = vadd.f32 %v179, %v186
      %v189 = vadd.f32 %v180, %v186
      %v190 = vmax.f32 %v188, 0.0
      %v191 = vmax.f32 %v189, 0.0
      %192 = vst [vmem:[#allocation7] sm:$0xff] %v190
      %193 = vst [vmem:[#allocation7 + $0x8] sm:$0xff] %v191
    $region33: #{tpu_custom_call.1} parent=1 // pred_fallthru
      _
    // Predicated region
    $region34: #{tpu_custom_call.1} parent=1 // pred_check
      _
    $region35: #{tpu_custom_call.1} parent=1 // pred_check_branch
      %195 = sbr.rel (0) target = $region37
    $region36: #{tpu_custom_call.1} parent=1 // pred_region
      %s197 = ssub.s32 256, 256
      %198 = vsyncadd [#allocation4], %s197
      %s199 = sshll.u32 [#allocation7], 4
      %s200 = int_to_ptr.vmem [resolvable:$true] %s199
      %205 = dma.vmem_to_hbm [thread:$0]  %s200, 256, %s4, [#allocation4], 128, 128, 8
    $region37: #{tpu_custom_call.1} parent=1 // pred_fallthru
      _
    // Predicated region
    $region38: #{tpu_custom_call.1} parent=1 // pred_check
      _
    $region39: #{tpu_custom_call.1} parent=1 // pred_check_branch
      %207 = sbr.rel (0) target = $region41
    $region40: #{tpu_custom_call.1} parent=1 // pred_region
      %208 = dma.done [#allocation4], 256
    $region41: #{tpu_custom_call.1} parent=1 // pred_fallthru
      _
    %209 = vsyncpa [#allocation3], 1
    %210 = vsyncpa [#allocation6], 1
    %211 = vsyncpa [#allocation4], 1

</llo_original>
